<compile_context>
chip_gen: v7x
topology: tpu7x:2x2x1
jax: 0.10.0
libtpu: 0.0.40
codegen_flags: <defaults>
</compile_context>

<pallas_src>
import jax
import jax.numpy as jnp
from jax import lax
from jax.experimental import pallas as pl
from jax.experimental.pallas import tpu as pltpu


SUBLANE = 8           # f32 sublane granularity for the batch (row) dim
MAX_ROW_TILE = 2048   # large row tile amortizes per-grid-step overhead
NUM_CORE_SPLIT = 2    # aim for >=2 grid steps so v7x's two TensorCores get work


def _round_up(n: int, m: int) -> int:
    return ((n + m - 1) // m) * m


def learn_text_kernel(x_ref, w1_ref, b1_ref, w2_ref, b2_ref, o_ref):
    # ---- Linear 1: (tb, fin) @ (fin, emb) + b1 ----
    x = x_ref[...]
    h = jnp.dot(x, w1_ref[...], preferred_element_type=jnp.float32) + b1_ref[...]
    # Flatten(): no-op for 2-D activations.
    # ---- ReLU ----
    h = jnp.maximum(h, 0.0)
    # ---- Linear 2: (tb, emb) @ (emb, emb) + b2 ----
    h = jnp.dot(h, w2_ref[...], preferred_element_type=jnp.float32) + b2_ref[...]
    # ---- Tanh ----
    h = jnp.tanh(h)
    # ---- Norm(): L2 normalize along the feature dim, norm clamped at 1e-12 ----
    sq = jnp.sum(h * h, axis=-1, keepdims=True)
    # maximum(sqrt(sq), 1e-12) == sqrt(maximum(sq, 1e-24)); rsqrt runs on the EUP.
    inv = lax.rsqrt(jnp.maximum(sq, 1e-24))
    o_ref[...] = h * inv


@jax.jit
def learn_text_forward(x, w1, b1, w2, b2):
    B, fin = x.shape
    emb_dim = w2.shape[1]

    # Row tile: big enough to amortize per-step fixed cost, small enough that
    # the grid has >= NUM_CORE_SPLIT steps when B allows (megacore on v7x).
    tb = min(MAX_ROW_TILE,
             _round_up(max(pl.cdiv(B, NUM_CORE_SPLIT), SUBLANE), SUBLANE))
    grid = (pl.cdiv(B, tb),)

    # VMEM budget: double-buffered x/out tiles + resident weights/biases, with
    # generous headroom for compiler scratch. Still tiny vs v7x's 32 MiB scoped.
    vmem_bytes = 4 * (2 * tb * fin + 2 * tb * emb_dim        # x / out pipeline
                      + fin * emb_dim + emb_dim * emb_dim    # w1, w2
                      + 2 * emb_dim)                         # b1, b2
    vmem_limit = min(max(4 * vmem_bytes, 4 << 20), 32 << 20)

    return pl.pallas_call(
        learn_text_kernel,
        out_shape=jax.ShapeDtypeStruct((B, emb_dim), jnp.float32),
        grid=grid,
        in_specs=[
            pl.BlockSpec((tb, fin), lambda i: (i, 0)),           # x: streamed row tiles
            pl.BlockSpec((fin, emb_dim), lambda i: (0, 0)),      # w1: VMEM-resident
            pl.BlockSpec((1, emb_dim), lambda i: (0, 0)),        # b1: VMEM-resident
            pl.BlockSpec((emb_dim, emb_dim), lambda i: (0, 0)),  # w2: VMEM-resident
            pl.BlockSpec((1, emb_dim), lambda i: (0, 0)),        # b2: VMEM-resident
        ],
        out_specs=pl.BlockSpec((tb, emb_dim), lambda i: (i, 0)),
        compiler_params=pltpu.CompilerParams(
            dimension_semantics=("parallel",),   # megacore split on v7x
            vmem_limit_bytes=vmem_limit,
        ),
    )(x, w1, b1, w2, b2)


def init_params(key, text_dim, emb_dim):
    """Deterministic synthetic init (same fan-in style as nn.Linear default)."""
    k1, k2, k3, k4 = jax.random.split(key, 4)
    in1 = 2 * text_dim
    lim1 = 1.0 / jnp.sqrt(in1)
    lim2 = 1.0 / jnp.sqrt(emb_dim)
    # stored as (in, out): kernel computes x @ W + b
    w1 = jax.random.uniform(k1, (in1, emb_dim), jnp.float32, -lim1, lim1)
    b1 = jax.random.uniform(k2, (1, emb_dim), jnp.float32, -lim1, lim1)
    w2 = jax.random.uniform(k3, (emb_dim, emb_dim), jnp.float32, -lim2, lim2)
    b2 = jax.random.uniform(k4, (1, emb_dim), jnp.float32, -lim2, lim2)
    return w1, b1, w2, b2


def reference_forward(x, w1, b1, w2, b2):
    """Pure-JAX reference mirroring the PyTorch module."""
    h = x @ w1 + b1
    h = jnp.maximum(h, 0.0)
    h = h @ w2 + b2
    h = jnp.tanh(h)
    nrm = jnp.maximum(jnp.linalg.norm(h, ord=2, axis=1, keepdims=True), 1e-12)
    return h / nrm


if __name__ == "__main__":
    # Small shapes consistent with the module: x is (batch, 2*text_dim).
    batch = 8
    text_dim = 16   # input feature dim = 2*text_dim = 32
    emb_dim = 32

    key = jax.random.PRNGKey(0)
    kx, kp = jax.random.split(key)
    x = jax.random.normal(kx, (batch, 2 * text_dim), dtype=jnp.float32)
    w1, b1, w2, b2 = init_params(kp, text_dim, emb_dim)

    out = learn_text_forward(x, w1, b1, w2, b2)
    out = jax.block_until_ready(out)

    ref = reference_forward(x, w1, b1, w2, b2)
    assert out.shape == (batch, emb_dim)
    assert jnp.allclose(out, ref, atol=1e-5, rtol=1e-5), "mismatch vs JAX reference"

    print("KERNEL_OK")
</pallas_src>

<mosaic_0001>
module attributes {stable_mosaic.version = 11 : i64} {
  func.func @learn_text_kernel(%arg0: i32, %arg1: memref<8x32xf32, #tpu.memory_space<vmem>>, %arg2: memref<32x32xf32, #tpu.memory_space<vmem>>, %arg3: memref<1x32xf32, #tpu.memory_space<vmem>>, %arg4: memref<32x32xf32, #tpu.memory_space<vmem>>, %arg5: memref<1x32xf32, #tpu.memory_space<vmem>>, %arg6: memref<8x32xf32, #tpu.memory_space<vmem>>) attributes {dimension_semantics = [#tpu.dimension_semantics<parallel>], iteration_bounds = array<i64: 1>, scalar_prefetch = 0 : i64, scratch_operands = 0 : i64, tpu.core_type = #tpu.core_type<tc>, window_params = [{transform_indices = @transform_0, window_bounds = array<i64: 8, 32>}, {pipeline_mode = #tpu.pipeline_mode<synchronous>, transform_indices = @transform_1, window_bounds = array<i64: 32, 32>}, {pipeline_mode = #tpu.pipeline_mode<synchronous>, transform_indices = @transform_2, window_bounds = array<i64: 1, 32>}, {pipeline_mode = #tpu.pipeline_mode<synchronous>, transform_indices = @transform_3, window_bounds = array<i64: 32, 32>}, {pipeline_mode = #tpu.pipeline_mode<synchronous>, transform_indices = @transform_4, window_bounds = array<i64: 1, 32>}, {transform_indices = @transform_5, window_bounds = array<i64: 8, 32>}]} {
    %c0 = arith.constant 0 : index
    %c0_0 = arith.constant 0 : index
    %0 = vector.load %arg1[%c0, %c0_0] : memref<8x32xf32, #tpu.memory_space<vmem>>, vector<8x32xf32>
    %c0_1 = arith.constant 0 : index
    %c0_2 = arith.constant 0 : index
    %1 = vector.load %arg2[%c0_1, %c0_2] : memref<32x32xf32, #tpu.memory_space<vmem>>, vector<32x32xf32>
    %cst = arith.constant dense<0.000000e+00> : vector<8x32xf32>
    %2 = tpu.matmul %0, %1, %cst {dimension_numbers = #tpu.dot_dimension_numbers<[1], [0], [0], [1], [0, 0, 1, 1], [], []>} : vector<8x32xf32>, vector<32x32xf32>, vector<8x32xf32> -> vector<8x32xf32>
    %c0_3 = arith.constant 0 : index
    %c0_4 = arith.constant 0 : index
    %3 = vector.load %arg3[%c0_3, %c0_4] : memref<1x32xf32, #tpu.memory_space<vmem>>, vector<1x32xf32>
    %4 = vector.broadcast %3 : vector<1x32xf32> to vector<8x32xf32>
    %5 = arith.addf %2, %4 : vector<8x32xf32>
    %cst_5 = arith.constant 0.000000e+00 : f32
    %6 = vector.broadcast %cst_5 : f32 to vector<8x32xf32>
    %7 = arith.maximumf %5, %6 : vector<8x32xf32>
    %c0_6 = arith.constant 0 : index
    %c0_7 = arith.constant 0 : index
    %8 = vector.load %arg4[%c0_6, %c0_7] : memref<32x32xf32, #tpu.memory_space<vmem>>, vector<32x32xf32>
    %cst_8 = arith.constant dense<0.000000e+00> : vector<8x32xf32>
    %9 = tpu.matmul %7, %8, %cst_8 {dimension_numbers = #tpu.dot_dimension_numbers<[1], [0], [0], [1], [0, 0, 1, 1], [], []>} : vector<8x32xf32>, vector<32x32xf32>, vector<8x32xf32> -> vector<8x32xf32>
    %c0_9 = arith.constant 0 : index
    %c0_10 = arith.constant 0 : index
    %10 = vector.load %arg5[%c0_9, %c0_10] : memref<1x32xf32, #tpu.memory_space<vmem>>, vector<1x32xf32>
    %11 = vector.broadcast %10 : vector<1x32xf32> to vector<8x32xf32>
    %12 = arith.addf %9, %11 : vector<8x32xf32>
    %13 = math.tanh %12 : vector<8x32xf32>
    %14 = arith.mulf %13, %13 : vector<8x32xf32>
    %cst_11 = arith.constant dense<0.000000e+00> : vector<8xf32>
    %15 = vector.multi_reduction <add>, %14, %cst_11 [1] : vector<8x32xf32> to vector<8xf32>
    %16 = vector.shape_cast %15 : vector<8xf32> to vector<8x1xf32>
    %cst_12 = arith.constant 1.000000e-24 : f32
    %17 = vector.broadcast %cst_12 : f32 to vector<8x1xf32>
    %18 = arith.maximumf %16, %17 : vector<8x1xf32>
    %19 = math.rsqrt %18 : vector<8x1xf32>
    %20 = vector.broadcast %19 : vector<8x1xf32> to vector<8x32xf32>
    %21 = arith.mulf %13, %20 : vector<8x32xf32>
    %c0_13 = arith.constant 0 : index
    %c0_14 = arith.constant 0 : index
    %22 = vector.load %arg6[%c0_13, %c0_14] : memref<8x32xf32, #tpu.memory_space<vmem>>, vector<8x32xf32>
    tpu.vector_store %arg6[%c0_13, %c0_14], %21 {strides = array<i32>} : memref<8x32xf32, #tpu.memory_space<vmem>>, vector<8x32xf32>,
    return
  }
  func.func @transform_0(%arg0: i32) -> (i32, i32) {
    %c0_i32 = arith.constant 0 : i32
    %c0_i32_0 = arith.constant 0 : i32
    return %arg0, %c0_i32 : i32, i32
  }
  func.func @transform_1(%arg0: i32) -> (i32, i32) {
    %c0_i32 = arith.constant 0 : i32
    %c0_i32_0 = arith.constant 0 : i32
    %c0_i32_1 = arith.constant 0 : i32
    return %c0_i32, %c0_i32_0 : i32, i32
  }
  func.func @transform_2(%arg0: i32) -> (i32, i32) {
    %c0_i32 = arith.constant 0 : i32
    %c0_i32_0 = arith.constant 0 : i32
    %c0_i32_1 = arith.constant 0 : i32
    return %c0_i32, %c0_i32_0 : i32, i32
  }
  func.func @transform_3(%arg0: i32) -> (i32, i32) {
    %c0_i32 = arith.constant 0 : i32
    %c0_i32_0 = arith.constant 0 : i32
    %c0_i32_1 = arith.constant 0 : i32
    return %c0_i32, %c0_i32_0 : i32, i32
  }
  func.func @transform_4(%arg0: i32) -> (i32, i32) {
    %c0_i32 = arith.constant 0 : i32
    %c0_i32_0 = arith.constant 0 : i32
    %c0_i32_1 = arith.constant 0 : i32
    return %c0_i32, %c0_i32_0 : i32, i32
  }
  func.func @transform_5(%arg0: i32) -> (i32, i32) {
    %c0_i32 = arith.constant 0 : i32
    %c0_i32_0 = arith.constant 0 : i32
    return %arg0, %c0_i32 : i32, i32
  }
}

</mosaic_0001>

<llo_original>
// kernel: learn_text_forward.1
$region0: #{learn_text_forward.1}
  #allocation0 [shape = 'u32[]', space=smem, size = 0x4, offset = 0x4, fixed_abs, tag = 'smem constant byte address 0x4 - core index']
  #allocation1 [shape = 'u32[144,128]{1,0:T(1,128)}', space=vmem, size = 0x12000, scoped, tag = 'internal scratch']
  %s0 = inlined_call_operand.hbm [shape: f32[8,32], index: 0, kind: input, shape index: {}]
  %s1 = inlined_call_operand.hbm [shape: f32[32,32], index: 1, kind: input, shape index: {}]
  %s2 = inlined_call_operand.vmem [shape: f32[1,32], index: 2, kind: input, shape index: {}]
  %s3 = inlined_call_operand.hbm [shape: f32[32,32], index: 3, kind: input, shape index: {}]
  %s4 = inlined_call_operand.vmem [shape: f32[1,32], index: 4, kind: input, shape index: {}]
  %s5 = inlined_call_operand.hbm [shape: f32[8,32], index: 5, kind: output, shape index: {}]
  %s6 = sld [smem:[#allocation0]]
  $region42: #{learn_text_forward.1} parent=0
    _
  %s8 = ssub.s32 1, %s6
  %s9 = scalar_select 0, %s8, %s6
  $region1: #{learn_text_forward.1} parent=0
    #allocation2 [shape = 'u8[4096]{0}', space=vmem, size = 0x1000, scoped, tag = 'input window, operand 0, single buffered']
    #allocation3 [shape = 's32[1]{0}', space=sflag, size = 0x4, scoped, tag = 'scoped memory for learn_text_forward.1']
    #allocation4 [shape = 's32[1]{0}', space=sflag, size = 0x4, scoped, tag = 'scoped memory for learn_text_forward.1']
    #allocation5 [shape = 'u8[16384]{0}', space=vmem, size = 0x4000, scoped, tag = 'input window, operand 1, single buffered']
    #allocation6 [shape = 's32[1]{0}', space=sflag, size = 0x4, scoped, tag = 'scoped memory for learn_text_forward.1']
    #allocation7 [shape = 'u8[16384]{0}', space=vmem, size = 0x4000, scoped, tag = 'input window, operand 3, single buffered']
    #allocation8 [shape = 'u8[4096]{0}', space=vmem, size = 0x1000, scoped, tag = 'output window, operand 0, single buffered']
    %10 = vsyncpa [#allocation3], 0
    %11 = vsyncpa [#allocation6], 0
    %12 = vsyncpa [#allocation4], 0
    // Predicated region
    $region2: #{learn_text_forward.1} parent=1 // pred_check
      _
    $region3: #{learn_text_forward.1} parent=1 // pred_check_branch
      %14 = sbr.rel (0) target = $region5
    $region4: #{learn_text_forward.1} parent=1 // pred_region
      %s16 = ssub.s32 128, 128
      %17 = vsyncadd [#allocation3], %s16
      %s19 = sshll.u32 [#allocation2], 4
      %s20 = int_to_ptr.vmem [resolvable:$true] %s19
      %22 = dma.hbm_to_vmem [thread:$0]  %s0, 128, %s20, [#allocation3]
    $region5: #{learn_text_forward.1} parent=1 // pred_fallthru
      _
    // Predicated region
    $region6: #{learn_text_forward.1} parent=1 // pred_check
      _
    $region7: #{learn_text_forward.1} parent=1 // pred_check_branch
      %24 = sbr.rel (0) target = $region9
    $region8: #{learn_text_forward.1} parent=1 // pred_region
      %s26 = ssub.s32 512, 512
      %27 = vsyncadd [#allocation6], %s26
      %s28 = sshll.u32 [#allocation5], 4
      %s29 = int_to_ptr.vmem [resolvable:$true] %s28
      %34 = dma.hbm_to_vmem [thread:$0]  %s1, 512, %s29, [#allocation6], 128, 128, 8
    $region9: #{learn_text_forward.1} parent=1 // pred_fallthru
      _
    // Predicated region
    $region10: #{learn_text_forward.1} parent=1 // pred_check
      _
    $region11: #{learn_text_forward.1} parent=1 // pred_check_branch
      %36 = sbr.rel (0) target = $region13
    $region12: #{learn_text_forward.1} parent=1 // pred_region
      _
    $region13: #{learn_text_forward.1} parent=1 // pred_fallthru
      _
    // Predicated region
    $region14: #{learn_text_forward.1} parent=1 // pred_check
      _
    $region15: #{learn_text_forward.1} parent=1 // pred_check_branch
      %38 = sbr.rel (0) target = $region17
    $region16: #{learn_text_forward.1} parent=1 // pred_region
      %s40 = ssub.s32 512, 512
      %41 = vsyncadd [#allocation6], %s40
      %s42 = sshll.u32 [#allocation7], 4
      %s43 = int_to_ptr.vmem [resolvable:$true] %s42
      %48 = dma.hbm_to_vmem [thread:$0]  %s3, 512, %s43, [#allocation6], 128, 128, 8
    $region17: #{learn_text_forward.1} parent=1 // pred_fallthru
      _
    // Predicated region
    $region18: #{learn_text_forward.1} parent=1 // pred_check
      _
    $region19: #{learn_text_forward.1} parent=1 // pred_check_branch
      %50 = sbr.rel (0) target = $region21
    $region20: #{learn_text_forward.1} parent=1 // pred_region
      _
    $region21: #{learn_text_forward.1} parent=1 // pred_fallthru
      _
    // Predicated region
    $region22: #{learn_text_forward.1} parent=1 // pred_check
      _
    $region23: #{learn_text_forward.1} parent=1 // pred_check_branch
      %52 = sbr.rel (0) target = $region25
    $region24: #{learn_text_forward.1} parent=1 // pred_region
      %53 = dma.done [#allocation3], 128
    $region25: #{learn_text_forward.1} parent=1 // pred_fallthru
      _
    // Predicated region
    $region26: #{learn_text_forward.1} parent=1 // pred_check
      _
    $region27: #{learn_text_forward.1} parent=1 // pred_check_branch
      %55 = sbr.rel (0) target = $region29
    $region28: #{learn_text_forward.1} parent=1 // pred_region
      %56 = dma.done [#allocation6], 512
    $region29: #{learn_text_forward.1} parent=1 // pred_fallthru
      _
    // Predicated region
    $region30: #{learn_text_forward.1} parent=1 // pred_check
      _
    $region31: #{learn_text_forward.1} parent=1 // pred_check_branch
      %58 = sbr.rel (0) target = $region33
    $region32: #{learn_text_forward.1} parent=1 // pred_region
      %59 = dma.done [#allocation6], 512
    $region33: #{learn_text_forward.1} parent=1 // pred_fallthru
      _
    %v60 = vld [vmem:[#allocation2] sm:$0xff]
    %v61 = vld [vmem:[#allocation5] sm:$0xff]
    %v62 = vld [vmem:[#allocation5 + $0x8] sm:$0xff]
    %v63 = vld [vmem:[#allocation5 + $0x10] sm:$0xff]
    %v64 = vld [vmem:[#allocation5 + $0x18] sm:$0xff]
    %v65 = vld [vmem:[%s2] sm:$0x1]
    %v67 = vlaneseq
    %v68 = vshrl.u32 %v67, 7
    %v69 = vsub.s32 0, %v68
    %v70 = vrot.slane %v65, %v69
    %vm72 = vcmask 261120
    %v74 = vsel %vm72, %v60, 0
    %76 = vmatprep.subr.mxu0 0.0
    %77 = vmatpush1.msra.mxu0 %v61
    %78 = vmatprep.subr.mxu0 0.0
    %79 = vmatpush1.msra.mxu0 %v62
    %80 = vmatprep.subr.mxu0 0.0
    %81 = vmatpush1.msra.mxu0 %v63
    %82 = vmatprep.subr.mxu0 0.0
    %83 = vmatpush1.msra.mxu0 %v64
    %84 = vmatprep.subr.mxu0 0.0
    %85 = vmatpush1.msra.mxu0 0.0
    %86 = vmatprep.subr.mxu0 0.0
    %87 = vmatpush1.msra.mxu0 0.0
    %88 = vmatprep.subr.mxu0 0.0
    %89 = vmatpush1.msra.mxu0 0.0
    %90 = vmatprep.subr.mxu0 0.0
    %91 = vmatpush1.msra.mxu0 0.0
    %92 = vmatprep.subr.mxu0 0.0
    %93 = vmatpush1.msra.mxu0 0.0
    %94 = vmatprep.subr.mxu0 0.0
    %95 = vmatpush1.msra.mxu0 0.0
    %96 = vmatprep.subr.mxu0 0.0
    %97 = vmatpush1.msra.mxu0 0.0
    %98 = vmatprep.subr.mxu0 0.0
    %99 = vmatpush1.msra.mxu0 0.0
    %100 = vmatprep.subr.mxu0 0.0
    %101 = vmatpush1.msra.mxu0 0.0
    %102 = vmatprep.subr.mxu0 0.0
    %103 = vmatpush1.msra.mxu0 0.0
    %104 = vmatprep.subr.mxu0 0.0
    %105 = vmatpush1.msra.mxu0 0.0
    %106 = vmatprep.subr.mxu0 0.0
    %107 = vmatpush1.msra.mxu0 0.0
    %108 = vmatprep.subr.mxu0 0.0
    %109 = vmatpush1.msra.mxu0 0.0
    %110 = vmatprep.subr.mxu0 0.0
    %111 = vmatpush1.msra.mxu0 0.0
    %112 = vmatprep.subr.mxu0 0.0
    %113 = vmatpush1.msra.mxu0 0.0
    %114 = vmatprep.subr.mxu0 0.0
    %115 = vmatpush1.msra.mxu0 0.0
    %116 = vmatprep.subr.mxu0 0.0
    %117 = vmatpush1.msra.mxu0 0.0
    %118 = vmatprep.subr.mxu0 0.0
    %119 = vmatpush1.msra.mxu0 0.0
    %120 = vmatprep.subr.mxu0 0.0
    %121 = vmatpush1.msra.mxu0 0.0
    %122 = vmatprep.subr.mxu0 0.0
    %123 = vmatpush1.msra.mxu0 0.0
    %124 = vmatprep.subr.mxu0 0.0
    %125 = vmatpush1.msra.mxu0 0.0
    %126 = vmatprep.subr.mxu0 0.0
    %127 = vmatpush1.msra.mxu0 0.0
    %128 = vmatprep.subr.mxu0 0.0
    %129 = vmatpush1.msra.mxu0 0.0
    %130 = vmatprep.subr.mxu0 0.0
    %131 = vmatpush1.msra.mxu0 0.0
    %132 = vmatprep.subr.mxu0 0.0
    %133 = vmatpush1.msra.mxu0 0.0
    %134 = vmatprep.subr.mxu0 0.0
    %135 = vmatpush1.msra.mxu0 0.0
    %136 = vmatprep.subr.mxu0 0.0
    %137 = vmatpush1.msra.mxu0 0.0
    %138 = vmatprep.subr.mxu0 0.0
    %139 = vmatpush1.msra.mxu0 0.0
    %140 = vmatprep.mubr.f32.mxu0 0.0
    %141 = vmatmul.mubr.f32.gmra.mrb[0].mxu0 %v74
    %v142 = vpop.f32.mrb[0].mxu0
    %v143 = vadd.f32 %v70, %v142
    %v144 = vpop.f32.mrb[0].mxu0
    %145 = vdwg.mxu0
    %v146 = vmax.f32 %v143, 0.0
    %v147 = vld [vmem:[#allocation7] sm:$0xff]
    %v148 = vld [vmem:[#allocation7 + $0x8] sm:$0xff]
    %v149 = vld [vmem:[#allocation7 + $0x10] sm:$0xff]
    %v150 = vld [vmem:[#allocation7 + $0x18] sm:$0xff]
    %v151 = vld [vmem:[%s4] sm:$0x1]
    %v153 = vlaneseq
    %v154 = vshrl.u32 %v153, 7
    %v155 = vsub.s32 0, %v154
    %v156 = vrot.slane %v151, %v155
    %v159 = vsel %vm72, %v146, 0
    %161 = vmatprep.subr.mxu0 0.0
    %162 = vmatpush1.msra.mxu0 %v147
    %163 = vmatprep.subr.mxu0 0.0
    %164 = vmatpush1.msra.mxu0 %v148
    %165 = vmatprep.subr.mxu0 0.0
    %166 = vmatpush1.msra.mxu0 %v149
    %167 = vmatprep.subr.mxu0 0.0
    %168 = vmatpush1.msra.mxu0 %v150
    %169 = vmatprep.subr.mxu0 0.0
    %170 = vmatpush1.msra.mxu0 0.0
    %171 = vmatprep.subr.mxu0 0.0
    %172 = vmatpush1.msra.mxu0 0.0
    %173 = vmatprep.subr.mxu0 0.0
    %174 = vmatpush1.msra.mxu0 0.0
    %175 = vmatprep.subr.mxu0 0.0
    %176 = vmatpush1.msra.mxu0 0.0
    %177 = vmatprep.subr.mxu0 0.0
    %178 = vmatpush1.msra.mxu0 0.0
    %179 = vmatprep.subr.mxu0 0.0
    %180 = vmatpush1.msra.mxu0 0.0
    %181 = vmatprep.subr.mxu0 0.0
    %182 = vmatpush1.msra.mxu0 0.0
    %183 = vmatprep.subr.mxu0 0.0
    %184 = vmatpush1.msra.mxu0 0.0
    %185 = vmatprep.subr.mxu0 0.0
    %186 = vmatpush1.msra.mxu0 0.0
    %187 = vmatprep.subr.mxu0 0.0
    %188 = vmatpush1.msra.mxu0 0.0
    %189 = vmatprep.subr.mxu0 0.0
    %190 = vmatpush1.msra.mxu0 0.0
    %191 = vmatprep.subr.mxu0 0.0
    %192 = vmatpush1.msra.mxu0 0.0
    %193 = vmatprep.subr.mxu0 0.0
    %194 = vmatpush1.msra.mxu0 0.0
    %195 = vmatprep.subr.mxu0 0.0
    %196 = vmatpush1.msra.mxu0 0.0
    %197 = vmatprep.subr.mxu0 0.0
    %198 = vmatpush1.msra.mxu0 0.0
    %199 = vmatprep.subr.mxu0 0.0
    %200 = vmatpush1.msra.mxu0 0.0
    %201 = vmatprep.subr.mxu0 0.0
    %202 = vmatpush1.msra.mxu0 0.0
    %203 = vmatprep.subr.mxu0 0.0
    %204 = vmatpush1.msra.mxu0 0.0
    %205 = vmatprep.subr.mxu0 0.0
    %206 = vmatpush1.msra.mxu0 0.0
    %207 = vmatprep.subr.mxu0 0.0
    %208 = vmatpush1.msra.mxu0 0.0
    %209 = vmatprep.subr.mxu0 0.0
    %210 = vmatpush1.msra.mxu0 0.0
    %211 = vmatprep.subr.mxu0 0.0
    %212 = vmatpush1.msra.mxu0 0.0
    %213 = vmatprep.subr.mxu0 0.0
    %214 = vmatpush1.msra.mxu0 0.0
    %215 = vmatprep.subr.mxu0 0.0
    %216 = vmatpush1.msra.mxu0 0.0
    %217 = vmatprep.subr.mxu0 0.0
    %218 = vmatpush1.msra.mxu0 0.0
    %219 = vmatprep.subr.mxu0 0.0
    %220 = vmatpush1.msra.mxu0 0.0
    %221 = vmatprep.subr.mxu0 0.0
    %222 = vmatpush1.msra.mxu0 0.0
    %223 = vmatprep.subr.mxu0 0.0
    %224 = vmatpush1.msra.mxu0 0.0
    %225 = vmatprep.mubr.f32.mxu0 0.0
    %226 = vmatmul.mubr.f32.gmra.mrb[0].mxu0 %v159
    %v227 = vpop.f32.mrb[0].mxu0
    %v228 = vadd.f32 %v156, %v227
    %v229 = vpop.f32.mrb[0].mxu0
    %230 = vdwg.mxu0
    %v231 = vtanh.pop %v228
    %v232 = vmul.f32 %v231, %v231
    %v233 = vsel %vm72, %v232, 0.0
    %234 = vadd.xlane.f32.xlu0 %v233
    %v235 = vpop.xlane.xlu0 %234
    %v236 = vmax.f32 %v235, 1e-24
    %v237 = vrsqrt.pop %v236
    %v238 = vmul.f32 %v231, %v237
    %239 = vst.msk [vmem:[#allocation8] sm:$0xff] %vm72, %v238
    // Predicated region
    $region34: #{learn_text_forward.1} parent=1 // pred_check
      _
    $region35: #{learn_text_forward.1} parent=1 // pred_check_branch
      %241 = sbr.rel (0) target = $region37
    $region36: #{learn_text_forward.1} parent=1 // pred_region
      %s243 = ssub.s32 128, 128
      %244 = vsyncadd [#allocation4], %s243
      %s246 = sshll.u32 [#allocation8], 4
      %s247 = int_to_ptr.vmem [resolvable:$true] %s246
      %249 = dma.vmem_to_hbm [thread:$0]  %s247, 128, %s5, [#allocation4]
    $region37: #{learn_text_forward.1} parent=1 // pred_fallthru
      _
    // Predicated region
    $region38: #{learn_text_forward.1} parent=1 // pred_check
      _
    $region39: #{learn_text_forward.1} parent=1 // pred_check_branch
      %251 = sbr.rel (0) target = $region41
    $region40: #{learn_text_forward.1} parent=1 // pred_region
      %252 = dma.done [#allocation4], 128
    $region41: #{learn_text_forward.1} parent=1 // pred_fallthru
      _
    %253 = vsyncpa [#allocation3], 1
    %254 = vsyncpa [#allocation6], 1
    %255 = vsyncpa [#allocation4], 1

</llo_original>
